<compile_context>
chip_gen: v7x
topology: tpu7x:2x2x1
jax: 0.10.0
libtpu: 0.0.40
codegen_flags: <defaults>
</compile_context>

<pallas_src>
import numpy as np
import jax
import jax.numpy as jnp
from jax.experimental import pallas as pl
from jax.experimental.pallas import tpu as pltpu


def _round_up(x, m):
    return ((x + m - 1) // m) * m


# ---------------------------------------------------------------------------
# Pallas kernel: fused (patches @ W) + bias + ReLU  (one MXU matmul per tile)
# ---------------------------------------------------------------------------
def _matmul_bias_relu_kernel(x_ref, w_ref, b_ref, o_ref):
    acc = jnp.dot(x_ref[...], w_ref[...], preferred_element_type=jnp.float32)
    acc = acc + b_ref[...]                          # (1, Npad) broadcast, VPU
    o_ref[...] = jnp.maximum(acc, 0.0).astype(o_ref.dtype)


def matmul_bias_relu(patches, w_mat, bias, tm=256, compute_dtype=jnp.float32):
    """patches: (M, K), w_mat: (K, Cout), bias: (1, Cout) -> (M, Cout) f32.

    Pads K and Cout up to multiples of 128 (lane-dense, unmasked MXU feed and
    stores) and M up to a multiple of the M tile. Padded rows/lanes are
    sliced off in the wrapper.
    """
    M, K = patches.shape
    K2, Cout = w_mat.shape
    assert K == K2

    k_pad = _round_up(K, 128)            # lane-dense contraction dim
    n_pad = _round_up(Cout, 128)         # lane-dense output (unmasked vst)
    tm = min(tm, _round_up(M, 8))        # don't over-pad tiny M
    m_pad = _round_up(M, tm)

    patches_p = jnp.pad(patches.astype(compute_dtype),
                        ((0, m_pad - M), (0, k_pad - K)))
    w_p = jnp.pad(w_mat.astype(compute_dtype),
                  ((0, k_pad - K), (0, n_pad - Cout)))
    b_p = jnp.pad(bias.astype(jnp.float32), ((0, 0), (0, n_pad - Cout)))

    out = pl.pallas_call(
        _matmul_bias_relu_kernel,
        out_shape=jax.ShapeDtypeStruct((m_pad, n_pad), jnp.float32),
        grid_spec=pltpu.PrefetchScalarGridSpec(
            num_scalar_prefetch=0,
            grid=(m_pad // tm,),
            in_specs=[
                pl.BlockSpec((tm, k_pad), lambda i: (i, 0)),     # patch tile
                pl.BlockSpec((k_pad, n_pad), lambda i: (0, 0)),  # resident W
                pl.BlockSpec((1, n_pad), lambda i: (0, 0)),      # resident b
            ],
            out_specs=pl.BlockSpec((tm, n_pad), lambda i: (i, 0)),
        ),
        # Per-step VMEM (tm=256, K<=640, f32, double-buffered) is ~2-3 MiB:
        # well inside default scoped VMEM on v5e/v6e/v7x, so no explicit
        # vmem_limit_bytes needed.
        compiler_params=pltpu.CompilerParams(
            dimension_semantics=("parallel",)),
    )(patches_p, w_p, b_p)
    return out[:M, :Cout]


# ---------------------------------------------------------------------------
# Conv layer = NHWC im2col (strided slices, no transposes) + Pallas matmul
# ---------------------------------------------------------------------------
def conv2d_relu_pallas(x_nhwc, w_oihw, b, stride, compute_dtype=jnp.float32):
    N, H, W, Cin = x_nhwc.shape
    Cout, Cin2, KH, KW = w_oihw.shape
    assert Cin == Cin2
    OH = (H - KH) // stride + 1
    OW = (W - KW) // stride + 1

    # im2col in NHWC: each (kh, kw) offset is a contiguous strided view; the
    # concat is along the lane (channel) axis. K ordering = (kh, kw, cin).
    cols = []
    for i in range(KH):
        for j in range(KW):
            cols.append(
                x_nhwc[:, i:i + stride * OH:stride, j:j + stride * OW:stride, :])
    patches = jnp.concatenate(cols, axis=-1)          # (N, OH, OW, KH*KW*Cin)
    patches = patches.reshape(N * OH * OW, KH * KW * Cin)

    # PyTorch weight (Cout, Cin, KH, KW) -> (KH, KW, Cin, Cout) -> (K, Cout)
    # so the K ordering matches the patches above.
    w_mat = w_oihw.transpose(2, 3, 1, 0).reshape(KH * KW * Cin, Cout)

    out_flat = matmul_bias_relu(patches, w_mat, b.reshape(1, Cout),
                                compute_dtype=compute_dtype)
    return out_flat.reshape(N, OH, OW, Cout)          # stay NHWC


def nature_conv_forward(x_nchw, params, compute_dtype=jnp.float32):
    # One layout change up front; everything in between stays NHWC.
    x = jnp.transpose(x_nchw, (0, 2, 3, 1))
    h = conv2d_relu_pallas(x, params["w1"], params["b1"], 4, compute_dtype)
    h = conv2d_relu_pallas(h, params["w2"], params["b2"], 2, compute_dtype)
    h = conv2d_relu_pallas(h, params["w3"], params["b3"], 1, compute_dtype)
    # nn.Flatten() in PyTorch flattens NCHW channel-major: NHWC -> NCHW first.
    h = jnp.transpose(h, (0, 3, 1, 2))
    return h.reshape(h.shape[0], -1)


# ---------------------------------------------------------------------------
# Pure-JAX reference (lax.conv) for correctness check
# ---------------------------------------------------------------------------
def nature_conv_reference(x_nchw, params):
    def conv(x, w, b, s):
        y = jax.lax.conv_general_dilated(
            x, w, (s, s), "VALID",
            dimension_numbers=("NCHW", "OIHW", "NCHW"))
        return jax.nn.relu(y + b[None, :, None, None])
    h = conv(x_nchw, params["w1"], params["b1"], 4)
    h = conv(h, params["w2"], params["b2"], 2)
    h = conv(h, params["w3"], params["b3"], 1)
    return h.reshape(h.shape[0], -1)


if __name__ == "__main__":
    # visual_dim = (H, W, C) as in the PyTorch module; smallest spatial that
    # survives the three convs is 36; use 44 for a non-degenerate output.
    H, W, C = 44, 44, 4
    N = 2

    key = jax.random.PRNGKey(0)
    k = jax.random.split(key, 7)
    params = {
        "w1": 0.05 * jax.random.normal(k[0], (32, C, 8, 8), jnp.float32),
        "b1": 0.05 * jax.random.normal(k[1], (32,), jnp.float32),
        "w2": 0.05 * jax.random.normal(k[2], (64, 32, 4, 4), jnp.float32),
        "b2": 0.05 * jax.random.normal(k[3], (64,), jnp.float32),
        "w3": 0.05 * jax.random.normal(k[4], (64, 64, 3, 3), jnp.float32),
        "b3": 0.05 * jax.random.normal(k[5], (64,), jnp.float32),
    }
    x = jax.random.normal(k[6], (N, C, H, W), jnp.float32)   # NCHW, like PyTorch

    out = jax.block_until_ready(nature_conv_forward(x, params))
    ref = jax.block_until_ready(nature_conv_reference(x, params))

    # output_dim check: (44-8)//4+1=10 -> (10-4)//2+1=4 -> (4-3)//1+1=2 => 64*2*2
    assert out.shape == (N, 64 * 2 * 2), out.shape
    assert np.allclose(np.asarray(out), np.asarray(ref), atol=1e-4, rtol=1e-4)

    print("KERNEL_OK")
</pallas_src>

<mosaic_0001>
module attributes {stable_mosaic.version = 11 : i64} {
  func.func @_matmul_bias_relu_kernel(%arg0: i32, %arg1: memref<200x256xf32, #tpu.memory_space<vmem>>, %arg2: memref<256x128xf32, #tpu.memory_space<vmem>>, %arg3: memref<1x128xf32, #tpu.memory_space<vmem>>, %arg4: memref<200x128xf32, #tpu.memory_space<vmem>>) attributes {dimension_semantics = [#tpu.dimension_semantics<parallel>], iteration_bounds = array<i64: 1>, scalar_prefetch = 0 : i64, scratch_operands = 0 : i64, tpu.core_type = #tpu.core_type<tc>, window_params = [{transform_indices = @transform_0, window_bounds = array<i64: 200, 256>}, {pipeline_mode = #tpu.pipeline_mode<synchronous>, transform_indices = @transform_1, window_bounds = array<i64: 256, 128>}, {pipeline_mode = #tpu.pipeline_mode<synchronous>, transform_indices = @transform_2, window_bounds = array<i64: 1, 128>}, {transform_indices = @transform_3, window_bounds = array<i64: 200, 128>}]} {
    %c0 = arith.constant 0 : index
    %c0_0 = arith.constant 0 : index
    %0 = vector.load %arg1[%c0, %c0_0] : memref<200x256xf32, #tpu.memory_space<vmem>>, vector<200x256xf32>
    %c0_1 = arith.constant 0 : index
    %c0_2 = arith.constant 0 : index
    %1 = vector.load %arg2[%c0_1, %c0_2] : memref<256x128xf32, #tpu.memory_space<vmem>>, vector<256x128xf32>
    %cst = arith.constant dense<0.000000e+00> : vector<200x128xf32>
    %2 = tpu.matmul %0, %1, %cst {dimension_numbers = #tpu.dot_dimension_numbers<[1], [0], [0], [1], [0, 0, 1, 1], [], []>} : vector<200x256xf32>, vector<256x128xf32>, vector<200x128xf32> -> vector<200x128xf32>
    %c0_3 = arith.constant 0 : index
    %c0_4 = arith.constant 0 : index
    %3 = vector.load %arg3[%c0_3, %c0_4] : memref<1x128xf32, #tpu.memory_space<vmem>>, vector<1x128xf32>
    %4 = vector.broadcast %3 : vector<1x128xf32> to vector<200x128xf32>
    %5 = arith.addf %2, %4 : vector<200x128xf32>
    %cst_5 = arith.constant 0.000000e+00 : f32
    %6 = vector.broadcast %cst_5 : f32 to vector<200x128xf32>
    %7 = arith.maximumf %5, %6 : vector<200x128xf32>
    %c0_6 = arith.constant 0 : index
    %c0_7 = arith.constant 0 : index
    %8 = vector.load %arg4[%c0_6, %c0_7] : memref<200x128xf32, #tpu.memory_space<vmem>>, vector<200x128xf32>
    tpu.vector_store %arg4[%c0_6, %c0_7], %7 {strides = array<i32>} : memref<200x128xf32, #tpu.memory_space<vmem>>, vector<200x128xf32>,
    return
  }
  func.func @transform_0(%arg0: i32) -> (i32, i32) {
    %c0_i32 = arith.constant 0 : i32
    %c0_i32_0 = arith.constant 0 : i32
    return %arg0, %c0_i32 : i32, i32
  }
  func.func @transform_1(%arg0: i32) -> (i32, i32) {
    %c0_i32 = arith.constant 0 : i32
    %c0_i32_0 = arith.constant 0 : i32
    %c0_i32_1 = arith.constant 0 : i32
    return %c0_i32, %c0_i32_0 : i32, i32
  }
  func.func @transform_2(%arg0: i32) -> (i32, i32) {
    %c0_i32 = arith.constant 0 : i32
    %c0_i32_0 = arith.constant 0 : i32
    %c0_i32_1 = arith.constant 0 : i32
    return %c0_i32, %c0_i32_0 : i32, i32
  }
  func.func @transform_3(%arg0: i32) -> (i32, i32) {
    %c0_i32 = arith.constant 0 : i32
    %c0_i32_0 = arith.constant 0 : i32
    return %arg0, %c0_i32 : i32, i32
  }
}

</mosaic_0001>

<llo_original>
// kernel: tpu_custom_call.1
$region0: #{tpu_custom_call.1}
  #allocation0 [shape = 'u32[]', space=smem, size = 0x4, offset = 0x4, fixed_abs, tag = 'smem constant byte address 0x4 - core index']
  #allocation1 [shape = 'u32[144,128]{1,0:T(1,128)}', space=vmem, size = 0x12000, scoped, tag = 'internal scratch']
  %s0 = inlined_call_operand.hbm [shape: f32[200,256], index: 0, kind: input, shape index: {}]
  %s1 = inlined_call_operand.hbm [shape: f32[256,128], index: 1, kind: input, shape index: {}]
  %s2 = inlined_call_operand.vmem [shape: f32[1,128], index: 2, kind: input, shape index: {}]
  %s3 = inlined_call_operand.hbm [shape: f32[200,128], index: 3, kind: output, shape index: {}]
  %s4 = sld [smem:[#allocation0]]
  $region30: #{tpu_custom_call.1} parent=0
    _
  %s6 = ssub.s32 1, %s4
  %s7 = scalar_select 0, %s6, %s4
  $region1: #{tpu_custom_call.1} parent=0
    #allocation2 [shape = 'u8[204800]{0}', space=vmem, size = 0x32000, scoped, tag = 'input window, operand 0, single buffered']
    #allocation3 [shape = 's32[1]{0}', space=sflag, size = 0x4, scoped, tag = 'scoped memory for tpu_custom_call.1']
    #allocation4 [shape = 's32[1]{0}', space=sflag, size = 0x4, scoped, tag = 'scoped memory for tpu_custom_call.1']
    #allocation5 [shape = 'u8[131072]{0}', space=vmem, size = 0x20000, scoped, tag = 'input window, operand 1, single buffered']
    #allocation6 [shape = 's32[1]{0}', space=sflag, size = 0x4, scoped, tag = 'scoped memory for tpu_custom_call.1']
    #allocation7 [shape = 'u8[102400]{0}', space=vmem, size = 0x19000, scoped, tag = 'output window, operand 0, single buffered']
    %8 = vsyncpa [#allocation3], 0
    %9 = vsyncpa [#allocation6], 0
    %10 = vsyncpa [#allocation4], 0
    // Predicated region
    $region2: #{tpu_custom_call.1} parent=1 // pred_check
      _
    $region3: #{tpu_custom_call.1} parent=1 // pred_check_branch
      %12 = sbr.rel (0) target = $region5
    $region4: #{tpu_custom_call.1} parent=1 // pred_region
      %s14 = ssub.s32 6400, 6400
      %15 = vsyncadd [#allocation3], %s14
      %s16 = sshll.u32 [#allocation2], 4
      %s17 = int_to_ptr.vmem [resolvable:$true] %s16
      %22 = dma.hbm_to_vmem [thread:$0]  %s0, 6400, %s17, [#allocation3], 256, 256, 16
    $region5: #{tpu_custom_call.1} parent=1 // pred_fallthru
      _
    // Predicated region
    $region6: #{tpu_custom_call.1} parent=1 // pred_check
      _
    $region7: #{tpu_custom_call.1} parent=1 // pred_check_branch
      %24 = sbr.rel (0) target = $region9
    $region8: #{tpu_custom_call.1} parent=1 // pred_region
      %s26 = ssub.s32 4096, 4096
      %27 = vsyncadd [#allocation6], %s26
      %s28 = sshll.u32 [#allocation5], 4
      %s29 = int_to_ptr.vmem [resolvable:$true] %s28
      %34 = dma.hbm_to_vmem [thread:$0]  %s1, 4096, %s29, [#allocation6], 128, 128, 8
    $region9: #{tpu_custom_call.1} parent=1 // pred_fallthru
      _
    // Predicated region
    $region10: #{tpu_custom_call.1} parent=1 // pred_check
      _
    $region11: #{tpu_custom_call.1} parent=1 // pred_check_branch
      %36 = sbr.rel (0) target = $region13
    $region12: #{tpu_custom_call.1} parent=1 // pred_region
      _
    $region13: #{tpu_custom_call.1} parent=1 // pred_fallthru
      _
    // Predicated region
    $region14: #{tpu_custom_call.1} parent=1 // pred_check
      _
    $region15: #{tpu_custom_call.1} parent=1 // pred_check_branch
      %38 = sbr.rel (0) target = $region17
    $region16: #{tpu_custom_call.1} parent=1 // pred_region
      %39 = dma.done [#allocation3], 6400
    $region17: #{tpu_custom_call.1} parent=1 // pred_fallthru
      _
    // Predicated region
    $region18: #{tpu_custom_call.1} parent=1 // pred_check
      _
    $region19: #{tpu_custom_call.1} parent=1 // pred_check_branch
      %41 = sbr.rel (0) target = $region21
    $region20: #{tpu_custom_call.1} parent=1 // pred_region
      %42 = dma.done [#allocation6], 4096
    $region21: #{tpu_custom_call.1} parent=1 // pred_fallthru
      _
    %v43 = vld [vmem:[#allocation2] sm:$0xff]
    %v44 = vld [vmem:[#allocation2 + $0x8] sm:$0xff]
    %v45 = vld [vmem:[#allocation2 + $0x10] sm:$0xff]
    %v46 = vld [vmem:[#allocation2 + $0x18] sm:$0xff]
    %v47 = vld [vmem:[#allocation2 + $0x20] sm:$0xff]
    %v48 = vld [vmem:[#allocation2 + $0x28] sm:$0xff]
    %v49 = vld [vmem:[#allocation2 + $0x30] sm:$0xff]
    %v50 = vld [vmem:[#allocation2 + $0x38] sm:$0xff]
    %v51 = vld [vmem:[#allocation2 + $0x40] sm:$0xff]
    %v52 = vld [vmem:[#allocation2 + $0x48] sm:$0xff]
    %v53 = vld [vmem:[#allocation2 + $0x50] sm:$0xff]
    %v54 = vld [vmem:[#allocation2 + $0x58] sm:$0xff]
    %v55 = vld [vmem:[#allocation2 + $0x60] sm:$0xff]
    %v56 = vld [vmem:[#allocation2 + $0x68] sm:$0xff]
    %v57 = vld [vmem:[#allocation2 + $0x70] sm:$0xff]
    %v58 = vld [vmem:[#allocation2 + $0x78] sm:$0xff]
    %v59 = vld [vmem:[#allocation2 + $0x80] sm:$0xff]
    %v60 = vld [vmem:[#allocation2 + $0x88] sm:$0xff]
    %v61 = vld [vmem:[#allocation2 + $0x90] sm:$0xff]
    %v62 = vld [vmem:[#allocation2 + $0x98] sm:$0xff]
    %v63 = vld [vmem:[#allocation2 + $0xa0] sm:$0xff]
    %v64 = vld [vmem:[#allocation2 + $0xa8] sm:$0xff]
    %v65 = vld [vmem:[#allocation2 + $0xb0] sm:$0xff]
    %v66 = vld [vmem:[#allocation2 + $0xb8] sm:$0xff]
    %v67 = vld [vmem:[#allocation2 + $0xc0] sm:$0xff]
    %v68 = vld [vmem:[#allocation2 + $0xc8] sm:$0xff]
    %v69 = vld [vmem:[#allocation2 + $0xd0] sm:$0xff]
    %v70 = vld [vmem:[#allocation2 + $0xd8] sm:$0xff]
    %v71 = vld [vmem:[#allocation2 + $0xe0] sm:$0xff]
    %v72 = vld [vmem:[#allocation2 + $0xe8] sm:$0xff]
    %v73 = vld [vmem:[#allocation2 + $0xf0] sm:$0xff]
    %v74 = vld [vmem:[#allocation2 + $0xf8] sm:$0xff]
    %v75 = vld [vmem:[#allocation2 + $0x100] sm:$0xff]
    %v76 = vld [vmem:[#allocation2 + $0x108] sm:$0xff]
    %v77 = vld [vmem:[#allocation2 + $0x110] sm:$0xff]
    %v78 = vld [vmem:[#allocation2 + $0x118] sm:$0xff]
    %v79 = vld [vmem:[#allocation2 + $0x120] sm:$0xff]
    %v80 = vld [vmem:[#allocation2 + $0x128] sm:$0xff]
    %v81 = vld [vmem:[#allocation2 + $0x130] sm:$0xff]
    %v82 = vld [vmem:[#allocation2 + $0x138] sm:$0xff]
    %v83 = vld [vmem:[#allocation2 + $0x140] sm:$0xff]
    %v84 = vld [vmem:[#allocation2 + $0x148] sm:$0xff]
    %v85 = vld [vmem:[#allocation2 + $0x150] sm:$0xff]
    %v86 = vld [vmem:[#allocation2 + $0x158] sm:$0xff]
    %v87 = vld [vmem:[#allocation2 + $0x160] sm:$0xff]
    %v88 = vld [vmem:[#allocation2 + $0x168] sm:$0xff]
    %v89 = vld [vmem:[#allocation2 + $0x170] sm:$0xff]
    %v90 = vld [vmem:[#allocation2 + $0x178] sm:$0xff]
    %v91 = vld [vmem:[#allocation2 + $0x180] sm:$0xff]
    %v92 = vld [vmem:[#allocation2 + $0x188] sm:$0xff]
    %v93 = vld [vmem:[#allocation5] sm:$0xff]
    %v94 = vld [vmem:[#allocation5 + $0x8] sm:$0xff]
    %v95 = vld [vmem:[#allocation5 + $0x10] sm:$0xff]
    %v96 = vld [vmem:[#allocation5 + $0x18] sm:$0xff]
    %v97 = vld [vmem:[#allocation5 + $0x20] sm:$0xff]
    %v98 = vld [vmem:[#allocation5 + $0x28] sm:$0xff]
    %v99 = vld [vmem:[#allocation5 + $0x30] sm:$0xff]
    %v100 = vld [vmem:[#allocation5 + $0x38] sm:$0xff]
    %v101 = vld [vmem:[#allocation5 + $0x40] sm:$0xff]
    %v102 = vld [vmem:[#allocation5 + $0x48] sm:$0xff]
    %v103 = vld [vmem:[#allocation5 + $0x50] sm:$0xff]
    %v104 = vld [vmem:[#allocation5 + $0x58] sm:$0xff]
    %v105 = vld [vmem:[#allocation5 + $0x60] sm:$0xff]
    %v106 = vld [vmem:[#allocation5 + $0x68] sm:$0xff]
    %v107 = vld [vmem:[#allocation5 + $0x70] sm:$0xff]
    %v108 = vld [vmem:[#allocation5 + $0x78] sm:$0xff]
    %v109 = vld [vmem:[#allocation5 + $0x80] sm:$0xff]
    %v110 = vld [vmem:[#allocation5 + $0x88] sm:$0xff]
    %v111 = vld [vmem:[#allocation5 + $0x90] sm:$0xff]
    %v112 = vld [vmem:[#allocation5 + $0x98] sm:$0xff]
    %v113 = vld [vmem:[#allocation5 + $0xa0] sm:$0xff]
    %v114 = vld [vmem:[#allocation5 + $0xa8] sm:$0xff]
    %v115 = vld [vmem:[#allocation5 + $0xb0] sm:$0xff]
    %v116 = vld [vmem:[#allocation5 + $0xb8] sm:$0xff]
    %v117 = vld [vmem:[#allocation5 + $0xc0] sm:$0xff]
    %v118 = vld [vmem:[#allocation5 + $0xc8] sm:$0xff]
    %v119 = vld [vmem:[#allocation5 + $0xd0] sm:$0xff]
    %v120 = vld [vmem:[#allocation5 + $0xd8] sm:$0xff]
    %v121 = vld [vmem:[#allocation5 + $0xe0] sm:$0xff]
    %v122 = vld [vmem:[#allocation5 + $0xe8] sm:$0xff]
    %v123 = vld [vmem:[#allocation5 + $0xf0] sm:$0xff]
    %v124 = vld [vmem:[#allocation5 + $0xf8] sm:$0xff]
    %v125 = vld [vmem:[%s2] sm:$0x1]
    %v127 = vlaneseq
    %v128 = vshrl.u32 %v127, 7
    %v129 = vsub.s32 0, %v128
    %v130 = vrot.slane %v125, %v129
    %132 = vmatprep.subr.mxu0 0.0
    %133 = vmatpush1.msra.mxu0 %v93
    %134 = vmatprep.subr.mxu0 0.0
    %135 = vmatpush1.msra.mxu0 %v94
    %136 = vmatprep.subr.mxu0 0.0
    %137 = vmatpush1.msra.mxu0 %v95
    %138 = vmatprep.subr.mxu0 0.0
    %139 = vmatpush1.msra.mxu0 %v96
    %140 = vmatprep.subr.mxu0 0.0
    %141 = vmatpush1.msra.mxu0 %v97
    %142 = vmatprep.subr.mxu0 0.0
    %143 = vmatpush1.msra.mxu0 %v98
    %144 = vmatprep.subr.mxu0 0.0
    %145 = vmatpush1.msra.mxu0 %v99
    %146 = vmatprep.subr.mxu0 0.0
    %147 = vmatpush1.msra.mxu0 %v100
    %148 = vmatprep.subr.mxu0 0.0
    %149 = vmatpush1.msra.mxu0 %v101
    %150 = vmatprep.subr.mxu0 0.0
    %151 = vmatpush1.msra.mxu0 %v102
    %152 = vmatprep.subr.mxu0 0.0
    %153 = vmatpush1.msra.mxu0 %v103
    %154 = vmatprep.subr.mxu0 0.0
    %155 = vmatpush1.msra.mxu0 %v104
    %156 = vmatprep.subr.mxu0 0.0
    %157 = vmatpush1.msra.mxu0 %v105
    %158 = vmatprep.subr.mxu0 0.0
    %159 = vmatpush1.msra.mxu0 %v106
    %160 = vmatprep.subr.mxu0 0.0
    %161 = vmatpush1.msra.mxu0 %v107
    %162 = vmatprep.subr.mxu0 0.0
    %163 = vmatpush1.msra.mxu0 %v108
    %164 = vmatprep.subr.mxu0 0.0
    %165 = vmatpush1.msra.mxu0 %v109
    %166 = vmatprep.subr.mxu0 0.0
    %167 = vmatpush1.msra.mxu0 %v110
    %168 = vmatprep.subr.mxu0 0.0
    %169 = vmatpush1.msra.mxu0 %v111
    %170 = vmatprep.subr.mxu0 0.0
    %171 = vmatpush1.msra.mxu0 %v112
    %172 = vmatprep.subr.mxu0 0.0
    %173 = vmatpush1.msra.mxu0 %v113
    %174 = vmatprep.subr.mxu0 0.0
    %175 = vmatpush1.msra.mxu0 %v114
    %176 = vmatprep.subr.mxu0 0.0
    %177 = vmatpush1.msra.mxu0 %v115
    %178 = vmatprep.subr.mxu0 0.0
    %179 = vmatpush1.msra.mxu0 %v116
    %180 = vmatprep.subr.mxu0 0.0
    %181 = vmatpush1.msra.mxu0 %v117
    %182 = vmatprep.subr.mxu0 0.0
    %183 = vmatpush1.msra.mxu0 %v118
    %184 = vmatprep.subr.mxu0 0.0
    %185 = vmatpush1.msra.mxu0 %v119
    %186 = vmatprep.subr.mxu0 0.0
    %187 = vmatpush1.msra.mxu0 %v120
    %188 = vmatprep.subr.mxu0 0.0
    %189 = vmatpush1.msra.mxu0 %v121
    %190 = vmatprep.subr.mxu0 0.0
    %191 = vmatpush1.msra.mxu0 %v122
    %192 = vmatprep.subr.mxu0 0.0
    %193 = vmatpush1.msra.mxu0 %v123
    %194 = vmatprep.subr.mxu0 0.0
    %195 = vmatpush1.msra.mxu0 %v124
    %196 = vmatprep.mubr.f32.mxu0 %v44
    %197 = vmatmul.mubr.f32.gmra.mrb[0].mxu0 %v43
    %v198 = vpop.f32.mrb[0].mxu0
    %v199 = vadd.f32 %v130, %v198
    %v200 = vpop.f32.mrb[0].mxu0
    %201 = vmatprep.mubr.f32.mxu0 %v46
    %202 = vmatmul.mubr.f32.gmra.mrb[0].mxu0 %v45
    %v203 = vpop.f32.mrb[0].mxu0
    %v204 = vadd.f32 %v130, %v203
    %v205 = vpop.f32.mrb[0].mxu0
    %206 = vmatprep.mubr.f32.mxu0 %v48
    %207 = vmatmul.mubr.f32.gmra.mrb[0].mxu0 %v47
    %v208 = vpop.f32.mrb[0].mxu0
    %v209 = vadd.f32 %v130, %v208
    %v210 = vpop.f32.mrb[0].mxu0
    %211 = vmatprep.mubr.f32.mxu0 %v50
    %212 = vmatmul.mubr.f32.gmra.mrb[0].mxu0 %v49
    %v213 = vpop.f32.mrb[0].mxu0
    %v214 = vadd.f32 %v130, %v213
    %v215 = vpop.f32.mrb[0].mxu0
    %216 = vmatprep.mubr.f32.mxu0 %v52
    %217 = vmatmul.mubr.f32.gmra.mrb[0].mxu0 %v51
    %v218 = vpop.f32.mrb[0].mxu0
    %v219 = vadd.f32 %v130, %v218
    %v220 = vpop.f32.mrb[0].mxu0
    %221 = vmatprep.mubr.f32.mxu0 %v54
    %222 = vmatmul.mubr.f32.gmra.mrb[0].mxu0 %v53
    %v223 = vpop.f32.mrb[0].mxu0
    %v224 = vadd.f32 %v130, %v223
    %v225 = vpop.f32.mrb[0].mxu0
    %226 = vmatprep.mubr.f32.mxu0 %v56
    %227 = vmatmul.mubr.f32.gmra.mrb[0].mxu0 %v55
    %v228 = vpop.f32.mrb[0].mxu0
    %v229 = vadd.f32 %v130, %v228
    %v230 = vpop.f32.mrb[0].mxu0
    %231 = vmatprep.mubr.f32.mxu0 %v58
    %232 = vmatmul.mubr.f32.gmra.mrb[0].mxu0 %v57
    %v233 = vpop.f32.mrb[0].mxu0
    %v234 = vadd.f32 %v130, %v233
    %v235 = vpop.f32.mrb[0].mxu0
    %236 = vmatprep.mubr.f32.mxu0 %v60
    %237 = vmatmul.mubr.f32.gmra.mrb[0].mxu0 %v59
    %v238 = vpop.f32.mrb[0].mxu0
    %v239 = vadd.f32 %v130, %v238
    %v240 = vpop.f32.mrb[0].mxu0
    %241 = vmatprep.mubr.f32.mxu0 %v62
    %242 = vmatmul.mubr.f32.gmra.mrb[0].mxu0 %v61
    %v243 = vpop.f32.mrb[0].mxu0
    %v244 = vadd.f32 %v130, %v243
    %v245 = vpop.f32.mrb[0].mxu0
    %246 = vmatprep.mubr.f32.mxu0 %v64
    %247 = vmatmul.mubr.f32.gmra.mrb[0].mxu0 %v63
    %v248 = vpop.f32.mrb[0].mxu0
    %v249 = vadd.f32 %v130, %v248
    %v250 = vpop.f32.mrb[0].mxu0
    %251 = vmatprep.mubr.f32.mxu0 %v66
    %252 = vmatmul.mubr.f32.gmra.mrb[0].mxu0 %v65
    %v253 = vpop.f32.mrb[0].mxu0
    %v254 = vadd.f32 %v130, %v253
    %v255 = vpop.f32.mrb[0].mxu0
    %256 = vmatprep.mubr.f32.mxu0 %v68
    %257 = vmatmul.mubr.f32.gmra.mrb[0].mxu0 %v67
    %v258 = vpop.f32.mrb[0].mxu0
    %v259 = vadd.f32 %v130, %v258
    %v260 = vpop.f32.mrb[0].mxu0
    %261 = vmatprep.mubr.f32.mxu0 %v70
    %262 = vmatmul.mubr.f32.gmra.mrb[0].mxu0 %v69
    %v263 = vpop.f32.mrb[0].mxu0
    %v264 = vadd.f32 %v130, %v263
    %v265 = vpop.f32.mrb[0].mxu0
    %266 = vmatprep.mubr.f32.mxu0 %v72
    %267 = vmatmul.mubr.f32.gmra.mrb[0].mxu0 %v71
    %v268 = vpop.f32.mrb[0].mxu0
    %v269 = vadd.f32 %v130, %v268
    %v270 = vpop.f32.mrb[0].mxu0
    %271 = vmatprep.mubr.f32.mxu0 %v74
    %272 = vmatmul.mubr.f32.gmra.mrb[0].mxu0 %v73
    %v273 = vpop.f32.mrb[0].mxu0
    %v274 = vadd.f32 %v130, %v273
    %v275 = vpop.f32.mrb[0].mxu0
    %276 = vmatprep.mubr.f32.mxu0 %v76
    %277 = vmatmul.mubr.f32.gmra.mrb[0].mxu0 %v75
    %v278 = vpop.f32.mrb[0].mxu0
    %v279 = vadd.f32 %v130, %v278
    %v280 = vpop.f32.mrb[0].mxu0
    %281 = vmatprep.mubr.f32.mxu0 %v78
    %282 = vmatmul.mubr.f32.gmra.mrb[0].mxu0 %v77
    %v283 = vpop.f32.mrb[0].mxu0
    %v284 = vadd.f32 %v130, %v283
    %v285 = vpop.f32.mrb[0].mxu0
    %286 = vmatprep.mubr.f32.mxu0 %v80
    %287 = vmatmul.mubr.f32.gmra.mrb[0].mxu0 %v79
    %v288 = vpop.f32.mrb[0].mxu0
    %v289 = vadd.f32 %v130, %v288
    %v290 = vpop.f32.mrb[0].mxu0
    %291 = vmatprep.mubr.f32.mxu0 %v82
    %292 = vmatmul.mubr.f32.gmra.mrb[0].mxu0 %v81
    %v293 = vpop.f32.mrb[0].mxu0
    %v294 = vadd.f32 %v130, %v293
    %v295 = vpop.f32.mrb[0].mxu0
    %296 = vmatprep.mubr.f32.mxu0 %v84
    %297 = vmatmul.mubr.f32.gmra.mrb[0].mxu0 %v83
    %v298 = vpop.f32.mrb[0].mxu0
    %v299 = vadd.f32 %v130, %v298
    %v300 = vpop.f32.mrb[0].mxu0
    %301 = vmatprep.mubr.f32.mxu0 %v86
    %302 = vmatmul.mubr.f32.gmra.mrb[0].mxu0 %v85
    %v303 = vpop.f32.mrb[0].mxu0
    %v304 = vadd.f32 %v130, %v303
    %v305 = vpop.f32.mrb[0].mxu0
    %306 = vmatprep.mubr.f32.mxu0 %v88
    %307 = vmatmul.mubr.f32.gmra.mrb[0].mxu0 %v87
    %v308 = vpop.f32.mrb[0].mxu0
    %v309 = vadd.f32 %v130, %v308
    %v310 = vpop.f32.mrb[0].mxu0
    %311 = vmatprep.mubr.f32.mxu0 %v90
    %312 = vmatmul.mubr.f32.gmra.mrb[0].mxu0 %v89
    %v313 = vpop.f32.mrb[0].mxu0
    %v314 = vadd.f32 %v130, %v313
    %v315 = vpop.f32.mrb[0].mxu0
    %316 = vmatprep.mubr.f32.mxu0 %v92
    %317 = vmatmul.mubr.f32.gmra.mrb[0].mxu0 %v91
    %v318 = vpop.f32.mrb[0].mxu0
    %v319 = vadd.f32 %v130, %v318
    %v320 = vpop.f32.mrb[0].mxu0
    %321 = vdwg.mxu0
    %v322 = vmax.f32 %v199, 0.0
    %v323 = vmax.f32 %v204, 0.0
    %v324 = vmax.f32 %v209, 0.0
    %v325 = vmax.f32 %v214, 0.0
    %v326 = vmax.f32 %v219, 0.0
    %v327 = vmax.f32 %v224, 0.0
    %v328 = vmax.f32 %v229, 0.0
    %v329 = vmax.f32 %v234, 0.0
    %v330 = vmax.f32 %v239, 0.0
    %v331 = vmax.f32 %v244, 0.0
    %v332 = vmax.f32 %v249, 0.0
    %v333 = vmax.f32 %v254, 0.0
    %v334 = vmax.f32 %v259, 0.0
    %v335 = vmax.f32 %v264, 0.0
    %v336 = vmax.f32 %v269, 0.0
    %v337 = vmax.f32 %v274, 0.0
    %v338 = vmax.f32 %v279, 0.0
    %v339 = vmax.f32 %v284, 0.0
    %v340 = vmax.f32 %v289, 0.0
    %v341 = vmax.f32 %v294, 0.0
    %v342 = vmax.f32 %v299, 0.0
    %v343 = vmax.f32 %v304, 0.0
    %v344 = vmax.f32 %v309, 0.0
    %v345 = vmax.f32 %v314, 0.0
    %v346 = vmax.f32 %v319, 0.0
    %347 = vst [vmem:[#allocation7] sm:$0xff] %v322
    %348 = vst [vmem:[#allocation7 + $0x8] sm:$0xff] %v323
    %349 = vst [vmem:[#allocation7 + $0x10] sm:$0xff] %v324
    %350 = vst [vmem:[#allocation7 + $0x18] sm:$0xff] %v325
    %351 = vst [vmem:[#allocation7 + $0x20] sm:$0xff] %v326
    %352 = vst [vmem:[#allocation7 + $0x28] sm:$0xff] %v327
    %353 = vst [vmem:[#allocation7 + $0x30] sm:$0xff] %v328
    %354 = vst [vmem:[#allocation7 + $0x38] sm:$0xff] %v329
    %355 = vst [vmem:[#allocation7 + $0x40] sm:$0xff] %v330
    %356 = vst [vmem:[#allocation7 + $0x48] sm:$0xff] %v331
    %357 = vst [vmem:[#allocation7 + $0x50] sm:$0xff] %v332
    %358 = vst [vmem:[#allocation7 + $0x58] sm:$0xff] %v333
    %359 = vst [vmem:[#allocation7 + $0x60] sm:$0xff] %v334
    %360 = vst [vmem:[#allocation7 + $0x68] sm:$0xff] %v335
    %361 = vst [vmem:[#allocation7 + $0x70] sm:$0xff] %v336
    %362 = vst [vmem:[#allocation7 + $0x78] sm:$0xff] %v337
    %363 = vst [vmem:[#allocation7 + $0x80] sm:$0xff] %v338
    %364 = vst [vmem:[#allocation7 + $0x88] sm:$0xff] %v339
    %365 = vst [vmem:[#allocation7 + $0x90] sm:$0xff] %v340
    %366 = vst [vmem:[#allocation7 + $0x98] sm:$0xff] %v341
    %367 = vst [vmem:[#allocation7 + $0xa0] sm:$0xff] %v342
    %368 = vst [vmem:[#allocation7 + $0xa8] sm:$0xff] %v343
    %369 = vst [vmem:[#allocation7 + $0xb0] sm:$0xff] %v344
    %370 = vst [vmem:[#allocation7 + $0xb8] sm:$0xff] %v345
    %371 = vst [vmem:[#allocation7 + $0xc0] sm:$0xff] %v346
    // Predicated region
    $region22: #{tpu_custom_call.1} parent=1 // pred_check
      _
    $region23: #{tpu_custom_call.1} parent=1 // pred_check_branch
      %373 = sbr.rel (0) target = $region25
    $region24: #{tpu_custom_call.1} parent=1 // pred_region
      %s375 = ssub.s32 3200, 3200
      %376 = vsyncadd [#allocation4], %s375
      %s377 = sshll.u32 [#allocation7], 4
      %s378 = int_to_ptr.vmem [resolvable:$true] %s377
      %383 = dma.vmem_to_hbm [thread:$0]  %s378, 3200, %s3, [#allocation4], 128, 128, 8
    $region25: #{tpu_custom_call.1} parent=1 // pred_fallthru
      _
    // Predicated region
    $region26: #{tpu_custom_call.1} parent=1 // pred_check
      _
    $region27: #{tpu_custom_call.1} parent=1 // pred_check_branch
      %385 = sbr.rel (0) target = $region29
    $region28: #{tpu_custom_call.1} parent=1 // pred_region
      %386 = dma.done [#allocation4], 3200
    $region29: #{tpu_custom_call.1} parent=1 // pred_fallthru
      _
    %387 = vsyncpa [#allocation3], 1
    %388 = vsyncpa [#allocation6], 1
    %389 = vsyncpa [#allocation4], 1

</llo_original>
